<compile_context>
chip_gen: v7x
topology: tpu7x:2x2x1
jax: 0.10.0
libtpu: 0.0.40
codegen_flags: <defaults>
</compile_context>

<pallas_src>
import jax
import jax.numpy as jnp
from jax.experimental import pallas as pl
from jax.experimental.pallas import tpu as pltpu


def _critic_kernel(x_ref, w1_ref, w2_ref, w3_ref, b_ref, out_ref):
    # x_ref : (A+1, tb)   packed [state; action], batch on lanes
    # w1_ref: (H1, A+1)   layer-1 weights (feats already folded in)
    # w2_ref: (H2, H1)
    # w3_ref: (1,  H2)
    # b_ref : (H1+H2+1, 1) packed biases [b1; b2; b3]
    # out   : (1, tb)     lane-dense Q row
    h1_dim = w1_ref.shape[0]
    h2_dim = w2_ref.shape[0]

    b_all = b_ref[...]                                   # (H1+H2+1, 1), resident
    b1 = b_all[0:h1_dim, :]                              # (H1, 1)
    b2 = b_all[h1_dim:h1_dim + h2_dim, :]                # (H2, 1)
    b3 = b_all[h1_dim + h2_dim:h1_dim + h2_dim + 1, :]   # (1, 1)

    # Layer 1: (H1, A+1) @ (A+1, tb) -> (H1, tb)   (single K=A+1 MXU pass)
    h = jnp.dot(w1_ref[...], x_ref[...], preferred_element_type=jnp.float32) + b1
    h = jnp.maximum(h, 0.0)

    # Layer 2: (H2, H1) @ (H1, tb) -> (H2, tb)
    h = jnp.dot(w2_ref[...], h, preferred_element_type=jnp.float32) + b2
    h = jnp.maximum(h, 0.0)

    # Output layer (no activation): (1, H2) @ (H2, tb) -> (1, tb), lane-dense.
    out_ref[...] = (jnp.dot(w3_ref[...], h, preferred_element_type=jnp.float32)
                    + b3).astype(out_ref.dtype)


def critic_forward(state, action, params, *, tile_b=8192):
    """Pallas forward pass for _Critic. state: [B,1] f32, action: [B,A] f32."""
    B = state.shape[0]
    A = action.shape[1]
    H1 = params["w1a"].shape[1]
    H2 = params["w2"].shape[1]

    # --- Fold feats Linear(1->1) into layer 1 (exact identity). ---
    #   s = state*wf + bf ;  s @ w1s = state @ (wf*w1s) + bf*w1s
    wf = params["wf"][0, 0]
    bf = params["bf"][0, 0]
    w1s_eff = wf * params["w1s"]                               # (1, H1)
    b1_eff = params["b1"] + bf * params["w1s"]                 # (1, H1)

    # --- Feature-major (batch-on-lanes) weights / biases. One-time wrapper cost. ---
    w1t = jnp.concatenate([w1s_eff, params["w1a"]], axis=0).T.astype(jnp.float32)  # (H1, A+1)
    w2t = params["w2"].T.astype(jnp.float32)                                       # (H2, H1)
    w3t = params["w3"].T.astype(jnp.float32)                                       # (1,  H2)
    bpack = jnp.concatenate(
        [b1_eff.T, params["b2"].T, params["b3"].T], axis=0).astype(jnp.float32)    # (H1+H2+1, 1)

    # --- Packed, feature-major input: (A+1, B), batch on the lane axis. ---
    x = jnp.concatenate([state, action], axis=-1).T.astype(jnp.float32)            # (A+1, B)

    # --- Lane-axis tiling: multiples of 128 lanes. ---
    tb = min(tile_b, pl.cdiv(B, 128) * 128)
    if B > 128:
        # Keep >= 2 grid steps so v7x's "parallel" batch axis feeds both TCs.
        tb = min(tb, pl.cdiv(pl.cdiv(B, 2), 128) * 128)
    tb = max(128, (tb // 128) * 128)
    b_pad = pl.cdiv(B, tb) * tb
    if b_pad != B:
        x = jnp.pad(x, ((0, 0), (0, b_pad - B)))
    n_tiles = b_pad // tb

    cost = pl.CostEstimate(
        flops=2 * B * ((A + 1) * H1 + H1 * H2 + H2),
        transcendentals=0,
        bytes_accessed=4 * (b_pad * (A + 2)                     # input + output
                            + (A + 1) * H1 + H1 * H2 + H2       # weights
                            + H1 + H2 + 1),                     # biases
    )

    out = pl.pallas_call(
        _critic_kernel,
        out_shape=jax.ShapeDtypeStruct((1, b_pad), jnp.float32),
        grid=(n_tiles,),
        in_specs=[
            pl.BlockSpec((A + 1, tb), lambda i: (0, i)),        # packed input, lane-dense
            pl.BlockSpec((H1, A + 1), lambda i: (0, 0)),        # resident weights
            pl.BlockSpec((H2, H1), lambda i: (0, 0)),
            pl.BlockSpec((1, H2), lambda i: (0, 0)),
            pl.BlockSpec((H1 + H2 + 1, 1), lambda i: (0, 0)),   # packed biases
        ],
        out_specs=pl.BlockSpec((1, tb), lambda i: (0, i)),      # lane-dense Q row
        compiler_params=pltpu.CompilerParams(
            dimension_semantics=("parallel",)),                 # v7x: shard batch across 2 TCs
        cost_estimate=cost,
    )(x, w1t, w2t, w3t, bpack)

    return out[0, :B][:, None]                                  # back to (B, 1)


def _init_params(key, action_size, hiddens):
    """Deterministic synthetic parameters (shapes implied by _Critic.__init__)."""
    h1, h2 = hiddens
    ks = jax.random.split(key, 10)
    scale = 0.1
    p = {
        # feats: Linear(1, 1)
        "wf":  scale * jax.random.normal(ks[0], (1, 1), jnp.float32),
        "bf":  scale * jax.random.normal(ks[1], (1, 1), jnp.float32),
        # mlp layer 1: Linear(1 + A, h1), split into feat-part / action-part
        "w1s": scale * jax.random.normal(ks[2], (1, h1), jnp.float32),
        "w1a": scale * jax.random.normal(ks[3], (action_size, h1), jnp.float32),
        "b1":  scale * jax.random.normal(ks[4], (1, h1), jnp.float32),
        # mlp layer 2: Linear(h1, h2)
        "w2":  scale * jax.random.normal(ks[5], (h1, h2), jnp.float32),
        "b2":  scale * jax.random.normal(ks[6], (1, h2), jnp.float32),
        # mlp output: Linear(h2, 1)
        "w3":  scale * jax.random.normal(ks[7], (h2, 1), jnp.float32),
        "b3":  scale * jax.random.normal(ks[8], (1, 1), jnp.float32),
    }
    return p


def _reference(state, action, p):
    """Pure-JAX mirror of the PyTorch module (unfolded params)."""
    s = state @ p["wf"] + p["bf"]
    x = jnp.concatenate([s, action], axis=-1)
    w1 = jnp.concatenate([p["w1s"], p["w1a"]], axis=0)
    h = jnp.maximum(x @ w1 + p["b1"], 0.0)
    h = jnp.maximum(h @ p["w2"] + p["b2"], 0.0)
    return h @ p["w3"] + p["b3"]


if __name__ == "__main__":
    # Small, forward-consistent shapes: batch=8, state feature = 1 (feats is
    # MLP(1, [], 1)), action_size=4, critic_mlp_hiddens=[32, 32].
    B, A = 8, 4
    hiddens = (32, 32)

    key = jax.random.PRNGKey(0)
    k_state, k_action, k_params = jax.random.split(key, 3)

    state = jax.random.normal(k_state, (B, 1), jnp.float32)
    action = jax.random.normal(k_action, (B, A), jnp.float32)
    params = _init_params(k_params, A, hiddens)

    out = critic_forward(state, action, params)
    out = jax.block_until_ready(out)

    ref = _reference(state, action, params)
    assert out.shape == (B, 1)
    assert jnp.allclose(out, ref, atol=1e-5, rtol=1e-5), "mismatch vs reference"

    print("KERNEL_OK")
</pallas_src>

<mosaic_0001>
module attributes {stable_mosaic.version = 11 : i64} {
  func.func @_critic_kernel(%arg0: i32, %arg1: memref<5x128xf32, #tpu.memory_space<vmem>>, %arg2: memref<32x5xf32, #tpu.memory_space<vmem>>, %arg3: memref<32x32xf32, #tpu.memory_space<vmem>>, %arg4: memref<1x32xf32, #tpu.memory_space<vmem>>, %arg5: memref<65x1xf32, #tpu.memory_space<vmem>>, %arg6: memref<1x128xf32, #tpu.memory_space<vmem>>) attributes {dimension_semantics = [#tpu.dimension_semantics<parallel>], iteration_bounds = array<i64: 1>, scalar_prefetch = 0 : i64, scratch_operands = 0 : i64, tpu.core_type = #tpu.core_type<tc>, window_params = [{transform_indices = @transform_0, window_bounds = array<i64: 5, 128>}, {pipeline_mode = #tpu.pipeline_mode<synchronous>, transform_indices = @transform_1, window_bounds = array<i64: 32, 5>}, {pipeline_mode = #tpu.pipeline_mode<synchronous>, transform_indices = @transform_2, window_bounds = array<i64: 32, 32>}, {pipeline_mode = #tpu.pipeline_mode<synchronous>, transform_indices = @transform_3, window_bounds = array<i64: 1, 32>}, {pipeline_mode = #tpu.pipeline_mode<synchronous>, transform_indices = @transform_4, window_bounds = array<i64: 65, 1>}, {transform_indices = @transform_5, window_bounds = array<i64: 1, 128>}]} {
    %c0 = arith.constant 0 : index
    %c0_0 = arith.constant 0 : index
    %0 = vector.load %arg5[%c0, %c0_0] : memref<65x1xf32, #tpu.memory_space<vmem>>, vector<65x1xf32>
    %1 = vector.extract_strided_slice %0 {offsets = [0, 0], sizes = [32, 1], strides = [1, 1]} : vector<65x1xf32> to vector<32x1xf32>
    %2 = vector.extract_strided_slice %0 {offsets = [32, 0], sizes = [32, 1], strides = [1, 1]} : vector<65x1xf32> to vector<32x1xf32>
    %3 = vector.extract_strided_slice %0 {offsets = [64, 0], sizes = [1, 1], strides = [1, 1]} : vector<65x1xf32> to vector<1x1xf32>
    %c0_1 = arith.constant 0 : index
    %c0_2 = arith.constant 0 : index
    %4 = vector.load %arg2[%c0_1, %c0_2] : memref<32x5xf32, #tpu.memory_space<vmem>>, vector<32x5xf32>
    %c0_3 = arith.constant 0 : index
    %c0_4 = arith.constant 0 : index
    %5 = vector.load %arg1[%c0_3, %c0_4] : memref<5x128xf32, #tpu.memory_space<vmem>>, vector<5x128xf32>
    %cst = arith.constant dense<0.000000e+00> : vector<32x128xf32>
    %6 = tpu.matmul %4, %5, %cst {dimension_numbers = #tpu.dot_dimension_numbers<[1], [0], [0], [1], [0, 0, 1, 1], [], []>} : vector<32x5xf32>, vector<5x128xf32>, vector<32x128xf32> -> vector<32x128xf32>
    %7 = vector.broadcast %1 : vector<32x1xf32> to vector<32x128xf32>
    %8 = arith.addf %6, %7 : vector<32x128xf32>
    %cst_5 = arith.constant 0.000000e+00 : f32
    %9 = vector.broadcast %cst_5 : f32 to vector<32x128xf32>
    %10 = arith.maximumf %8, %9 : vector<32x128xf32>
    %c0_6 = arith.constant 0 : index
    %c0_7 = arith.constant 0 : index
    %11 = vector.load %arg3[%c0_6, %c0_7] : memref<32x32xf32, #tpu.memory_space<vmem>>, vector<32x32xf32>
    %cst_8 = arith.constant dense<0.000000e+00> : vector<32x128xf32>
    %12 = tpu.matmul %11, %10, %cst_8 {dimension_numbers = #tpu.dot_dimension_numbers<[1], [0], [0], [1], [0, 0, 1, 1], [], []>} : vector<32x32xf32>, vector<32x128xf32>, vector<32x128xf32> -> vector<32x128xf32>
    %13 = vector.broadcast %2 : vector<32x1xf32> to vector<32x128xf32>
    %14 = arith.addf %12, %13 : vector<32x128xf32>
    %cst_9 = arith.constant 0.000000e+00 : f32
    %15 = vector.broadcast %cst_9 : f32 to vector<32x128xf32>
    %16 = arith.maximumf %14, %15 : vector<32x128xf32>
    %c0_10 = arith.constant 0 : index
    %c0_11 = arith.constant 0 : index
    %17 = vector.load %arg4[%c0_10, %c0_11] : memref<1x32xf32, #tpu.memory_space<vmem>>, vector<1x32xf32>
    %cst_12 = arith.constant dense<0.000000e+00> : vector<1x128xf32>
    %18 = tpu.matmul %17, %16, %cst_12 {dimension_numbers = #tpu.dot_dimension_numbers<[1], [0], [0], [1], [0, 0, 1, 1], [], []>} : vector<1x32xf32>, vector<32x128xf32>, vector<1x128xf32> -> vector<1x128xf32>
    %19 = vector.broadcast %3 : vector<1x1xf32> to vector<1x128xf32>
    %20 = arith.addf %18, %19 : vector<1x128xf32>
    %c0_13 = arith.constant 0 : index
    %c0_14 = arith.constant 0 : index
    %21 = vector.load %arg6[%c0_13, %c0_14] : memref<1x128xf32, #tpu.memory_space<vmem>>, vector<1x128xf32>
    tpu.vector_store %arg6[%c0_13, %c0_14], %20 {strides = array<i32>} : memref<1x128xf32, #tpu.memory_space<vmem>>, vector<1x128xf32>,
    return
  }
  func.func @transform_0(%arg0: i32) -> (i32, i32) {
    %c0_i32 = arith.constant 0 : i32
    %c0_i32_0 = arith.constant 0 : i32
    return %c0_i32, %arg0 : i32, i32
  }
  func.func @transform_1(%arg0: i32) -> (i32, i32) {
    %c0_i32 = arith.constant 0 : i32
    %c0_i32_0 = arith.constant 0 : i32
    %c0_i32_1 = arith.constant 0 : i32
    return %c0_i32, %c0_i32_0 : i32, i32
  }
  func.func @transform_2(%arg0: i32) -> (i32, i32) {
    %c0_i32 = arith.constant 0 : i32
    %c0_i32_0 = arith.constant 0 : i32
    %c0_i32_1 = arith.constant 0 : i32
    return %c0_i32, %c0_i32_0 : i32, i32
  }
  func.func @transform_3(%arg0: i32) -> (i32, i32) {
    %c0_i32 = arith.constant 0 : i32
    %c0_i32_0 = arith.constant 0 : i32
    %c0_i32_1 = arith.constant 0 : i32
    return %c0_i32, %c0_i32_0 : i32, i32
  }
  func.func @transform_4(%arg0: i32) -> (i32, i32) {
    %c0_i32 = arith.constant 0 : i32
    %c0_i32_0 = arith.constant 0 : i32
    %c0_i32_1 = arith.constant 0 : i32
    return %c0_i32, %c0_i32_0 : i32, i32
  }
  func.func @transform_5(%arg0: i32) -> (i32, i32) {
    %c0_i32 = arith.constant 0 : i32
    %c0_i32_0 = arith.constant 0 : i32
    return %c0_i32, %arg0 : i32, i32
  }
}

</mosaic_0001>

<llo_original>
// kernel: tpu_custom_call.1
$region0: #{tpu_custom_call.1}
  #allocation0 [shape = 'u32[]', space=smem, size = 0x4, offset = 0x4, fixed_abs, tag = 'smem constant byte address 0x4 - core index']
  #allocation1 [shape = 'u32[144,128]{1,0:T(1,128)}', space=vmem, size = 0x12000, scoped, tag = 'internal scratch']
  %s0 = inlined_call_operand.vmem [shape: f32[5,128], index: 0, kind: input, shape index: {}]
  %s1 = inlined_call_operand.vmem [shape: f32[32,5], index: 1, kind: input, shape index: {}]
  %s2 = inlined_call_operand.vmem [shape: f32[32,32], index: 2, kind: input, shape index: {}]
  %s3 = inlined_call_operand.vmem [shape: f32[1,32], index: 3, kind: input, shape index: {}]
  %s4 = inlined_call_operand.vmem [shape: f32[65,1], index: 4, kind: input, shape index: {}]
  %s5 = inlined_call_operand.hbm [shape: f32[1,128], index: 5, kind: output, shape index: {}]
  %s6 = sld [smem:[#allocation0]]
  $region30: #{tpu_custom_call.1} parent=0
    _
  %s8 = ssub.s32 1, %s6
  %s9 = scalar_select 0, %s8, %s6
  $region1: #{tpu_custom_call.1} parent=0
    #allocation2 [shape = 'u8[512]{0}', space=vmem, size = 0x400, scoped, tag = 'output window, operand 0, single buffered']
    #allocation3 [shape = 's32[1]{0}', space=sflag, size = 0x4, scoped, tag = 'scoped memory for tpu_custom_call.1']
    %10 = vsyncpa [#allocation3], 0
    // Predicated region
    $region2: #{tpu_custom_call.1} parent=1 // pred_check
      _
    $region3: #{tpu_custom_call.1} parent=1 // pred_check_branch
      %12 = sbr.rel (0) target = $region5
    $region4: #{tpu_custom_call.1} parent=1 // pred_region
      _
    $region5: #{tpu_custom_call.1} parent=1 // pred_fallthru
      _
    // Predicated region
    $region6: #{tpu_custom_call.1} parent=1 // pred_check
      _
    $region7: #{tpu_custom_call.1} parent=1 // pred_check_branch
      %14 = sbr.rel (0) target = $region9
    $region8: #{tpu_custom_call.1} parent=1 // pred_region
      _
    $region9: #{tpu_custom_call.1} parent=1 // pred_fallthru
      _
    // Predicated region
    $region10: #{tpu_custom_call.1} parent=1 // pred_check
      _
    $region11: #{tpu_custom_call.1} parent=1 // pred_check_branch
      %16 = sbr.rel (0) target = $region13
    $region12: #{tpu_custom_call.1} parent=1 // pred_region
      _
    $region13: #{tpu_custom_call.1} parent=1 // pred_fallthru
      _
    // Predicated region
    $region14: #{tpu_custom_call.1} parent=1 // pred_check
      _
    $region15: #{tpu_custom_call.1} parent=1 // pred_check_branch
      %18 = sbr.rel (0) target = $region17
    $region16: #{tpu_custom_call.1} parent=1 // pred_region
      _
    $region17: #{tpu_custom_call.1} parent=1 // pred_fallthru
      _
    // Predicated region
    $region18: #{tpu_custom_call.1} parent=1 // pred_check
      _
    $region19: #{tpu_custom_call.1} parent=1 // pred_check_branch
      %20 = sbr.rel (0) target = $region21
    $region20: #{tpu_custom_call.1} parent=1 // pred_region
      _
    $region21: #{tpu_custom_call.1} parent=1 // pred_fallthru
      _
    %v21 = vld [vmem:[%s4] sm:$0xff]
    %v22 = vld [vmem:[%s4 + $0x8] sm:$0xff]
    %v23 = vld [vmem:[%s4 + $0x10] sm:$0xff]
    %v24 = vld [vmem:[%s4 + $0x18] sm:$0xff]
    %v25 = vld [vmem:[%s4 + $0x20] sm:$0xff]
    %v26 = vld [vmem:[%s4 + $0x28] sm:$0xff]
    %v27 = vld [vmem:[%s4 + $0x30] sm:$0xff]
    %v28 = vld [vmem:[%s4 + $0x38] sm:$0xff]
    %v29 = vld [vmem:[%s4 + $0x40] sm:$0x1]
    %v30 = vld [vmem:[%s1] sm:$0xff]
    %v31 = vld [vmem:[%s1 + $0x8] sm:$0xff]
    %v32 = vld [vmem:[%s1 + $0x10] sm:$0xff]
    %v33 = vld [vmem:[%s1 + $0x18] sm:$0xff]
    %v34 = vld [vmem:[%s0] sm:$0x1f]
    %36 = vset.pattern.permute.xlu0 0
    %37 = vperm.xlu0 %36, %v21
    %v38 = vpop.permute.xlu0 %37
    %41 = vset.pattern.permute.xlu0 0
    %42 = vperm.xlu0 %41, %v22
    %v43 = vpop.permute.xlu0 %42
    %46 = vset.pattern.permute.xlu0 0
    %47 = vperm.xlu0 %46, %v23
    %v48 = vpop.permute.xlu0 %47
    %51 = vset.pattern.permute.xlu0 0
    %52 = vperm.xlu0 %51, %v24
    %v53 = vpop.permute.xlu0 %52
    %vm55 = vcmask 39936
    %v57 = vsel %vm55, %v30, 0
    %v60 = vsel %vm55, %v31, 0
    %v63 = vsel %vm55, %v32, 0
    %v66 = vsel %vm55, %v33, 0
    %vm68 = vcmask 1044480
    %v70 = vsel %vm68, %v34, 0
    %72 = vmatprep.subr.mxu0 0.0
    %73 = vmatpush1.msra.mxu0 %v70
    %74 = vmatprep.subr.mxu0 0.0
    %75 = vmatpush1.msra.mxu0 0.0
    %76 = vmatprep.subr.mxu0 0.0
    %77 = vmatpush1.msra.mxu0 0.0
    %78 = vmatprep.subr.mxu0 0.0
    %79 = vmatpush1.msra.mxu0 0.0
    %80 = vmatprep.subr.mxu0 0.0
    %81 = vmatpush1.msra.mxu0 0.0
    %82 = vmatprep.subr.mxu0 0.0
    %83 = vmatpush1.msra.mxu0 0.0
    %84 = vmatprep.subr.mxu0 0.0
    %85 = vmatpush1.msra.mxu0 0.0
    %86 = vmatprep.subr.mxu0 0.0
    %87 = vmatpush1.msra.mxu0 0.0
    %88 = vmatprep.subr.mxu0 0.0
    %89 = vmatpush1.msra.mxu0 0.0
    %90 = vmatprep.subr.mxu0 0.0
    %91 = vmatpush1.msra.mxu0 0.0
    %92 = vmatprep.subr.mxu0 0.0
    %93 = vmatpush1.msra.mxu0 0.0
    %94 = vmatprep.subr.mxu0 0.0
    %95 = vmatpush1.msra.mxu0 0.0
    %96 = vmatprep.subr.mxu0 0.0
    %97 = vmatpush1.msra.mxu0 0.0
    %98 = vmatprep.subr.mxu0 0.0
    %99 = vmatpush1.msra.mxu0 0.0
    %100 = vmatprep.subr.mxu0 0.0
    %101 = vmatpush1.msra.mxu0 0.0
    %102 = vmatprep.subr.mxu0 0.0
    %103 = vmatpush1.msra.mxu0 0.0
    %104 = vmatprep.subr.mxu0 0.0
    %105 = vmatpush1.msra.mxu0 0.0
    %106 = vmatprep.subr.mxu0 0.0
    %107 = vmatpush1.msra.mxu0 0.0
    %108 = vmatprep.subr.mxu0 0.0
    %109 = vmatpush1.msra.mxu0 0.0
    %110 = vmatprep.subr.mxu0 0.0
    %111 = vmatpush1.msra.mxu0 0.0
    %112 = vmatprep.subr.mxu0 0.0
    %113 = vmatpush1.msra.mxu0 0.0
    %114 = vmatprep.subr.mxu0 0.0
    %115 = vmatpush1.msra.mxu0 0.0
    %116 = vmatprep.subr.mxu0 0.0
    %117 = vmatpush1.msra.mxu0 0.0
    %118 = vmatprep.subr.mxu0 0.0
    %119 = vmatpush1.msra.mxu0 0.0
    %120 = vmatprep.subr.mxu0 0.0
    %121 = vmatpush1.msra.mxu0 0.0
    %122 = vmatprep.subr.mxu0 0.0
    %123 = vmatpush1.msra.mxu0 0.0
    %124 = vmatprep.subr.mxu0 0.0
    %125 = vmatpush1.msra.mxu0 0.0
    %126 = vmatprep.subr.mxu0 0.0
    %127 = vmatpush1.msra.mxu0 0.0
    %128 = vmatprep.subr.mxu0 0.0
    %129 = vmatpush1.msra.mxu0 0.0
    %130 = vmatprep.subr.mxu0 0.0
    %131 = vmatpush1.msra.mxu0 0.0
    %132 = vmatprep.subr.mxu0 0.0
    %133 = vmatpush1.msra.mxu0 0.0
    %134 = vmatprep.subr.mxu0 0.0
    %135 = vmatpush1.msra.mxu0 0.0
    %136 = vmatprep.mubr.f32.mxu0 0.0
    %137 = vmatmul.mubr.f32.gmra.mrb[0].mxu0 %v57
    %v138 = vpop.f32.mrb[0].mxu0
    %v139 = vadd.f32 %v38, %v138
    %v140 = vpop.f32.mrb[0].mxu0
    %141 = vmatprep.mubr.f32.mxu0 0.0
    %142 = vmatmul.mubr.f32.gmra.mrb[0].mxu0 %v60
    %v143 = vpop.f32.mrb[0].mxu0
    %v144 = vadd.f32 %v43, %v143
    %v145 = vpop.f32.mrb[0].mxu0
    %146 = vmatprep.mubr.f32.mxu0 0.0
    %147 = vmatmul.mubr.f32.gmra.mrb[0].mxu0 %v63
    %v148 = vpop.f32.mrb[0].mxu0
    %v149 = vadd.f32 %v48, %v148
    %v150 = vpop.f32.mrb[0].mxu0
    %151 = vmatprep.mubr.f32.mxu0 0.0
    %152 = vmatmul.mubr.f32.gmra.mrb[0].mxu0 %v66
    %v153 = vpop.f32.mrb[0].mxu0
    %v154 = vadd.f32 %v53, %v153
    %v155 = vpop.f32.mrb[0].mxu0
    %156 = vdwg.mxu0
    %v157 = vmax.f32 %v139, 0.0
    %v158 = vmax.f32 %v144, 0.0
    %v159 = vmax.f32 %v149, 0.0
    %v160 = vmax.f32 %v154, 0.0
    %v161 = vld [vmem:[%s2] sm:$0xff]
    %v162 = vld [vmem:[%s2 + $0x8] sm:$0xff]
    %v163 = vld [vmem:[%s2 + $0x10] sm:$0xff]
    %v164 = vld [vmem:[%s2 + $0x18] sm:$0xff]
    %166 = vset.pattern.permute.xlu0 0
    %167 = vperm.xlu0 %166, %v25
    %v168 = vpop.permute.xlu0 %167
    %171 = vset.pattern.permute.xlu0 0
    %172 = vperm.xlu0 %171, %v26
    %v173 = vpop.permute.xlu0 %172
    %176 = vset.pattern.permute.xlu0 0
    %177 = vperm.xlu0 %176, %v27
    %v178 = vpop.permute.xlu0 %177
    %181 = vset.pattern.permute.xlu0 0
    %182 = vperm.xlu0 %181, %v28
    %v183 = vpop.permute.xlu0 %182
    %vm185 = vcmask 261120
    %v187 = vsel %vm185, %v161, 0
    %v190 = vsel %vm185, %v162, 0
    %v193 = vsel %vm185, %v163, 0
    %v196 = vsel %vm185, %v164, 0
    %198 = vmatprep.subr.mxu0 0.0
    %199 = vmatpush1.msra.mxu0 %v157
    %200 = vmatprep.subr.mxu0 0.0
    %201 = vmatpush1.msra.mxu0 %v158
    %202 = vmatprep.subr.mxu0 0.0
    %203 = vmatpush1.msra.mxu0 %v159
    %204 = vmatprep.subr.mxu0 0.0
    %205 = vmatpush1.msra.mxu0 %v160
    %206 = vmatprep.subr.mxu0 0.0
    %207 = vmatpush1.msra.mxu0 0.0
    %208 = vmatprep.subr.mxu0 0.0
    %209 = vmatpush1.msra.mxu0 0.0
    %210 = vmatprep.subr.mxu0 0.0
    %211 = vmatpush1.msra.mxu0 0.0
    %212 = vmatprep.subr.mxu0 0.0
    %213 = vmatpush1.msra.mxu0 0.0
    %214 = vmatprep.subr.mxu0 0.0
    %215 = vmatpush1.msra.mxu0 0.0
    %216 = vmatprep.subr.mxu0 0.0
    %217 = vmatpush1.msra.mxu0 0.0
    %218 = vmatprep.subr.mxu0 0.0
    %219 = vmatpush1.msra.mxu0 0.0
    %220 = vmatprep.subr.mxu0 0.0
    %221 = vmatpush1.msra.mxu0 0.0
    %222 = vmatprep.subr.mxu0 0.0
    %223 = vmatpush1.msra.mxu0 0.0
    %224 = vmatprep.subr.mxu0 0.0
    %225 = vmatpush1.msra.mxu0 0.0
    %226 = vmatprep.subr.mxu0 0.0
    %227 = vmatpush1.msra.mxu0 0.0
    %228 = vmatprep.subr.mxu0 0.0
    %229 = vmatpush1.msra.mxu0 0.0
    %230 = vmatprep.subr.mxu0 0.0
    %231 = vmatpush1.msra.mxu0 0.0
    %232 = vmatprep.subr.mxu0 0.0
    %233 = vmatpush1.msra.mxu0 0.0
    %234 = vmatprep.subr.mxu0 0.0
    %235 = vmatpush1.msra.mxu0 0.0
    %236 = vmatprep.subr.mxu0 0.0
    %237 = vmatpush1.msra.mxu0 0.0
    %238 = vmatprep.subr.mxu0 0.0
    %239 = vmatpush1.msra.mxu0 0.0
    %240 = vmatprep.subr.mxu0 0.0
    %241 = vmatpush1.msra.mxu0 0.0
    %242 = vmatprep.subr.mxu0 0.0
    %243 = vmatpush1.msra.mxu0 0.0
    %244 = vmatprep.subr.mxu0 0.0
    %245 = vmatpush1.msra.mxu0 0.0
    %246 = vmatprep.subr.mxu0 0.0
    %247 = vmatpush1.msra.mxu0 0.0
    %248 = vmatprep.subr.mxu0 0.0
    %249 = vmatpush1.msra.mxu0 0.0
    %250 = vmatprep.subr.mxu0 0.0
    %251 = vmatpush1.msra.mxu0 0.0
    %252 = vmatprep.subr.mxu0 0.0
    %253 = vmatpush1.msra.mxu0 0.0
    %254 = vmatprep.subr.mxu0 0.0
    %255 = vmatpush1.msra.mxu0 0.0
    %256 = vmatprep.subr.mxu0 0.0
    %257 = vmatpush1.msra.mxu0 0.0
    %258 = vmatprep.subr.mxu0 0.0
    %259 = vmatpush1.msra.mxu0 0.0
    %260 = vmatprep.subr.mxu0 0.0
    %261 = vmatpush1.msra.mxu0 0.0
    %262 = vmatprep.mubr.f32.mxu0 0.0
    %263 = vmatmul.mubr.f32.gmra.mrb[0].mxu0 %v187
    %v264 = vpop.f32.mrb[0].mxu0
    %v265 = vadd.f32 %v168, %v264
    %v266 = vpop.f32.mrb[0].mxu0
    %267 = vmatprep.mubr.f32.mxu0 0.0
    %268 = vmatmul.mubr.f32.gmra.mrb[0].mxu0 %v190
    %v269 = vpop.f32.mrb[0].mxu0
    %v270 = vadd.f32 %v173, %v269
    %v271 = vpop.f32.mrb[0].mxu0
    %272 = vmatprep.mubr.f32.mxu0 0.0
    %273 = vmatmul.mubr.f32.gmra.mrb[0].mxu0 %v193
    %v274 = vpop.f32.mrb[0].mxu0
    %v275 = vadd.f32 %v178, %v274
    %v276 = vpop.f32.mrb[0].mxu0
    %277 = vmatprep.mubr.f32.mxu0 0.0
    %278 = vmatmul.mubr.f32.gmra.mrb[0].mxu0 %v196
    %v279 = vpop.f32.mrb[0].mxu0
    %v280 = vadd.f32 %v183, %v279
    %v281 = vpop.f32.mrb[0].mxu0
    %282 = vdwg.mxu0
    %v283 = vmax.f32 %v265, 0.0
    %v284 = vmax.f32 %v270, 0.0
    %v285 = vmax.f32 %v275, 0.0
    %v286 = vmax.f32 %v280, 0.0
    %v287 = vld [vmem:[%s3] sm:$0x1]
    %289 = vset.pattern.permute.xlu0 0
    %290 = vperm.xlu0 %289, %v29
    %v291 = vpop.permute.xlu0 %290
    %v294 = vsel %vm185, %v287, 0
    %296 = vmatprep.subr.mxu0 0.0
    %297 = vmatpush1.msra.mxu0 %v283
    %298 = vmatprep.subr.mxu0 0.0
    %299 = vmatpush1.msra.mxu0 %v284
    %300 = vmatprep.subr.mxu0 0.0
    %301 = vmatpush1.msra.mxu0 %v285
    %302 = vmatprep.subr.mxu0 0.0
    %303 = vmatpush1.msra.mxu0 %v286
    %304 = vmatprep.subr.mxu0 0.0
    %305 = vmatpush1.msra.mxu0 0.0
    %306 = vmatprep.subr.mxu0 0.0
    %307 = vmatpush1.msra.mxu0 0.0
    %308 = vmatprep.subr.mxu0 0.0
    %309 = vmatpush1.msra.mxu0 0.0
    %310 = vmatprep.subr.mxu0 0.0
    %311 = vmatpush1.msra.mxu0 0.0
    %312 = vmatprep.subr.mxu0 0.0
    %313 = vmatpush1.msra.mxu0 0.0
    %314 = vmatprep.subr.mxu0 0.0
    %315 = vmatpush1.msra.mxu0 0.0
    %316 = vmatprep.subr.mxu0 0.0
    %317 = vmatpush1.msra.mxu0 0.0
    %318 = vmatprep.subr.mxu0 0.0
    %319 = vmatpush1.msra.mxu0 0.0
    %320 = vmatprep.subr.mxu0 0.0
    %321 = vmatpush1.msra.mxu0 0.0
    %322 = vmatprep.subr.mxu0 0.0
    %323 = vmatpush1.msra.mxu0 0.0
    %324 = vmatprep.subr.mxu0 0.0
    %325 = vmatpush1.msra.mxu0 0.0
    %326 = vmatprep.subr.mxu0 0.0
    %327 = vmatpush1.msra.mxu0 0.0
    %328 = vmatprep.subr.mxu0 0.0
    %329 = vmatpush1.msra.mxu0 0.0
    %330 = vmatprep.subr.mxu0 0.0
    %331 = vmatpush1.msra.mxu0 0.0
    %332 = vmatprep.subr.mxu0 0.0
    %333 = vmatpush1.msra.mxu0 0.0
    %334 = vmatprep.subr.mxu0 0.0
    %335 = vmatpush1.msra.mxu0 0.0
    %336 = vmatprep.subr.mxu0 0.0
    %337 = vmatpush1.msra.mxu0 0.0
    %338 = vmatprep.subr.mxu0 0.0
    %339 = vmatpush1.msra.mxu0 0.0
    %340 = vmatprep.subr.mxu0 0.0
    %341 = vmatpush1.msra.mxu0 0.0
    %342 = vmatprep.subr.mxu0 0.0
    %343 = vmatpush1.msra.mxu0 0.0
    %344 = vmatprep.subr.mxu0 0.0
    %345 = vmatpush1.msra.mxu0 0.0
    %346 = vmatprep.subr.mxu0 0.0
    %347 = vmatpush1.msra.mxu0 0.0
    %348 = vmatprep.subr.mxu0 0.0
    %349 = vmatpush1.msra.mxu0 0.0
    %350 = vmatprep.subr.mxu0 0.0
    %351 = vmatpush1.msra.mxu0 0.0
    %352 = vmatprep.subr.mxu0 0.0
    %353 = vmatpush1.msra.mxu0 0.0
    %354 = vmatprep.subr.mxu0 0.0
    %355 = vmatpush1.msra.mxu0 0.0
    %356 = vmatprep.subr.mxu0 0.0
    %357 = vmatpush1.msra.mxu0 0.0
    %358 = vmatprep.subr.mxu0 0.0
    %359 = vmatpush1.msra.mxu0 0.0
    %360 = vmatprep.mubr.f32.mxu0 0.0
    %361 = vmatmul.mubr.f32.gmra.mrb[0].mxu0 %v294
    %v362 = vpop.f32.mrb[0].mxu0
    %v363 = vadd.f32 %v291, %v362
    %v364 = vpop.f32.mrb[0].mxu0
    %365 = vdwg.mxu0
    %366 = vst [vmem:[#allocation2] sm:$0x1] %v363
    // Predicated region
    $region22: #{tpu_custom_call.1} parent=1 // pred_check
      _
    $region23: #{tpu_custom_call.1} parent=1 // pred_check_branch
      %368 = sbr.rel (0) target = $region25
    $region24: #{tpu_custom_call.1} parent=1 // pred_region
      %s370 = ssub.s32 16, 16
      %371 = vsyncadd [#allocation3], %s370
      %s373 = sshll.u32 [#allocation2], 4
      %s374 = int_to_ptr.vmem [resolvable:$true] %s373
      %376 = dma.vmem_to_hbm [thread:$0]  %s374, 16, %s5, [#allocation3]
    $region25: #{tpu_custom_call.1} parent=1 // pred_fallthru
      _
    // Predicated region
    $region26: #{tpu_custom_call.1} parent=1 // pred_check
      _
    $region27: #{tpu_custom_call.1} parent=1 // pred_check_branch
      %378 = sbr.rel (0) target = $region29
    $region28: #{tpu_custom_call.1} parent=1 // pred_region
      %379 = dma.done [#allocation3], 16
    $region29: #{tpu_custom_call.1} parent=1 // pred_fallthru
      _
    %380 = vsyncpa [#allocation3], 1

</llo_original>
